<compile_context>
chip_gen: v7x
topology: tpu7x:2x2x1
jax: 0.10.0
libtpu: 0.0.40
codegen_flags: <defaults>
</compile_context>

<pallas_src>
import math

import jax
import jax.numpy as jnp
from jax import lax
from jax.experimental import pallas as pl
from jax.experimental.pallas import tpu as pltpu


# ---------------------------------------------------------------------------
# VMEM budgeting (generation aware; conservative fallback = v7x 64 MiB/core)
# ---------------------------------------------------------------------------
_VMEM_BYTES_CACHE = [None]


def _physical_vmem_bytes():
    if _VMEM_BYTES_CACHE[0] is None:
        vmem = 64 * 1024 * 1024            # conservative default (v7x)
        try:
            info = pltpu.get_tpu_info()
            for name in ("vmem_capacity_bytes", "vmem_bytes", "vmem_size_bytes"):
                val = getattr(info, name, None)
                if isinstance(val, int) and val > 0:
                    vmem = val
                    break
        except Exception:
            pass
        _VMEM_BYTES_CACHE[0] = vmem
    return _VMEM_BYTES_CACHE[0]


def _vmem_limit_bytes():
    # Scoped VMEM we request from Mosaic: comfortably below physical capacity.
    return min(int(0.7 * _physical_vmem_bytes()), 96 * 1024 * 1024)


def _sublane_base(dtype):
    return {4: 8, 2: 16, 1: 32}.get(jnp.dtype(dtype).itemsize, 8)


def _pick_lane_tile(dim, target):
    """Lane-dim tile: full when small, else largest 128-multiple divisor."""
    if dim <= target:
        return dim
    t = (target // 128) * 128
    while t >= 128:
        if dim % t == 0:
            return t
        t -= 128
    return dim


# ---------------------------------------------------------------------------
# Kernel 1: dense projection  y = x @ w_t + b  (in_proj and out_proj)
# ---------------------------------------------------------------------------
def _linear_kernel(x_ref, w_ref, b_ref, o_ref):
    acc = jnp.dot(x_ref[...], w_ref[...], preferred_element_type=jnp.float32)
    o_ref[...] = (acc + b_ref[...].astype(jnp.float32)).astype(o_ref.dtype)


def _linear_acc_kernel(x_ref, w_ref, b_ref, o_ref, acc_ref):
    k = pl.program_id(2)

    @pl.when(k == 0)
    def _():
        acc_ref[...] = jnp.zeros_like(acc_ref)

    acc_ref[...] += jnp.dot(x_ref[...], w_ref[...],
                            preferred_element_type=jnp.float32)

    @pl.when(k == pl.num_programs(2) - 1)
    def _():
        o_ref[...] = (acc_ref[...] + b_ref[...].astype(jnp.float32)
                      ).astype(o_ref.dtype)


def linear(x, w_t, b, *, tm_target=1024):
    """x: (M, Ein), w_t: (Ein, Eout), b: (Eout,) -> (M, Eout)."""
    M, Ein = x.shape
    Eout = w_t.shape[1]
    isz = x.dtype.itemsize
    base = _sublane_base(x.dtype)
    budget = int(0.4 * _vmem_limit_bytes())
    b2 = b.reshape(1, Eout)

    tn = Eout if Eout <= 2048 else _pick_lane_tile(Eout, 512)

    if Ein <= 1024:
        # Full-K contraction: no reduction grid axis, no accumulator scratch.
        tk = Ein
        tm = M if M <= tm_target else (tm_target // base) * base
        while (tm > base
               and 2 * (tm * tk + tk * tn + tn) * isz + 3 * tm * tn * 4 > budget):
            tm = max(base, (tm // 2 // base) * base)
        grid = (pl.cdiv(M, tm), pl.cdiv(Eout, tn))
        return pl.pallas_call(
            _linear_kernel,
            out_shape=jax.ShapeDtypeStruct((M, Eout), x.dtype),
            grid=grid,
            in_specs=[
                pl.BlockSpec((tm, tk), lambda i, j: (i, 0)),
                pl.BlockSpec((tk, tn), lambda i, j: (0, j)),
                pl.BlockSpec((1, tn), lambda i, j: (0, j)),
            ],
            out_specs=pl.BlockSpec((tm, tn), lambda i, j: (i, j)),
            compiler_params=pltpu.CompilerParams(
                dimension_semantics=("parallel", "parallel"),
                vmem_limit_bytes=_vmem_limit_bytes()),
        )(x, w_t, b2)

    # Large-K path (not hit at this module's sizes): K-tiled f32 accumulator.
    tk = _pick_lane_tile(Ein, 512)
    tm = M if M <= 512 else (512 // base) * base
    grid = (pl.cdiv(M, tm), pl.cdiv(Eout, tn), Ein // tk)
    return pl.pallas_call(
        _linear_acc_kernel,
        out_shape=jax.ShapeDtypeStruct((M, Eout), x.dtype),
        grid=grid,
        in_specs=[
            pl.BlockSpec((tm, tk), lambda i, j, k: (i, k)),
            pl.BlockSpec((tk, tn), lambda i, j, k: (k, j)),
            pl.BlockSpec((1, tn), lambda i, j, k: (0, j)),
        ],
        out_specs=pl.BlockSpec((tm, tn), lambda i, j, k: (i, j)),
        scratch_shapes=[pltpu.VMEM((tm, tn), jnp.float32)],
        compiler_params=pltpu.CompilerParams(
            dimension_semantics=("parallel", "parallel", "arbitrary"),
            vmem_limit_bytes=_vmem_limit_bytes()),
    )(x, w_t, b2)


# ---------------------------------------------------------------------------
# Kernel 2: scaled-dot-product attention.  One grid step = (batch, T-tile),
# all heads processed per step (per-head probs never leave VMEM).
#   logits = q @ k^T    (scaling folded into the q projection)
#   probs  = softmax(logits, -1)      (exact normalization)
#   ctx    = probs @ v                (stored directly in (T, B, H, Dh))
#   head-mean probs produced in a single write -> both grid axes "parallel".
# ---------------------------------------------------------------------------
def _pick_t_tile(T, S, H, Dh, itemsize, budget):
    """Largest T-tile (divisor of T, multiple of 8, or T itself) whose per-step
    attention working set fits the VMEM budget."""
    def fits(t):
        kv = 2 * 2 * S * H * Dh * itemsize                 # k, v (double-buffered)
        qo = 2 * 2 * t * H * Dh * itemsize                 # q in + ctx out
        soft = 4 * H * t * S * 4                           # f32 logits/exp/probs temps
        wb = 2 * H * t * S * itemsize + 2 * t * S * 4      # logits + head-mean writeback
        return kv + qo + soft + wb <= budget

    if fits(T):
        return T
    cands = [t for t in range(8, T, 8) if T % t == 0]
    for t in reversed(cands):
        if fits(t):
            return t
    # TODO(synk): for very long sequences also tile over S (online softmax) and
    # split heads; here we fall back to the smallest legal T-tile.
    return cands[0] if cands else T


def _make_attn_kernel(with_logits):
    def kernel(q_ref, k_ref, v_ref, o_ref, *rest):
        if with_logits:
            l_ref, w_ref = rest
        else:
            (w_ref,) = rest
        n_heads = q_ref.shape[1]
        w_acc = None
        for h in range(n_heads):                        # static unroll, H is small
            qh = q_ref[:, h, :]                         # (tT, Dh)
            kh = k_ref[:, h, :]                         # (S,  Dh)
            vh = v_ref[:, h, :]                         # (S,  Dh)
            # logits = qh @ kh.T (contract over Dh, no materialized transpose)
            logits = lax.dot_general(qh, kh, (((1,), (1,)), ((), ())),
                                     preferred_element_type=jnp.float32)
            if with_logits:
                l_ref[h] = logits.astype(l_ref.dtype)
            m = jnp.max(logits, axis=-1, keepdims=True)
            e = jnp.exp(logits - m)
            denom = jnp.sum(e, axis=-1, keepdims=True)
            probs = e * (1.0 / denom)                   # exact: rows sum to 1
            ctx = jnp.dot(probs.astype(vh.dtype), vh,
                          preferred_element_type=jnp.float32)
            o_ref[:, h, :] = ctx.astype(o_ref.dtype)
            w_acc = probs if w_acc is None else w_acc + probs
        w_ref[...] = (w_acc * (1.0 / n_heads)).astype(w_ref.dtype)

    return kernel


def attention(qkv, *, need_logits=True):
    """qkv: (T, B, 3, H, Dh) packed q/k/v projections (q rows pre-scaled).

    Returns (ctx (T,B,H,Dh), [logits (B,H,T,S)], head-mean probs (B,T,S))."""
    T, B, three, H, Dh = qkv.shape
    assert three == 3
    S = T
    dt = qkv.dtype
    budget = int(0.6 * _vmem_limit_bytes())
    tT = _pick_t_tile(T, S, H, Dh, dt.itemsize, budget)
    grid = (B, T // tT)

    in_specs = [
        pl.BlockSpec((tT, None, None, H, Dh), lambda b, t: (t, b, 0, 0, 0)),
        pl.BlockSpec((S, None, None, H, Dh), lambda b, t: (0, b, 1, 0, 0)),
        pl.BlockSpec((S, None, None, H, Dh), lambda b, t: (0, b, 2, 0, 0)),
    ]
    out_shape = [jax.ShapeDtypeStruct((T, B, H, Dh), dt)]
    out_specs = [pl.BlockSpec((tT, None, H, Dh), lambda b, t: (t, b, 0, 0))]
    if need_logits:
        out_shape.append(jax.ShapeDtypeStruct((B, H, T, S), dt))
        out_specs.append(pl.BlockSpec((None, H, tT, S), lambda b, t: (b, 0, t, 0)))
    out_shape.append(jax.ShapeDtypeStruct((B, T, S), jnp.float32))
    out_specs.append(pl.BlockSpec((None, tT, S), lambda b, t: (b, t, 0)))

    return pl.pallas_call(
        _make_attn_kernel(need_logits),
        out_shape=tuple(out_shape),
        grid=grid,
        in_specs=in_specs,
        out_specs=tuple(out_specs),
        compiler_params=pltpu.CompilerParams(
            dimension_semantics=("parallel", "parallel"),
            vmem_limit_bytes=_vmem_limit_bytes()),
    )(qkv, qkv, qkv)


# ---------------------------------------------------------------------------
# Module wrapper
# ---------------------------------------------------------------------------
class MultiheadAttentionPallas:
    def __init__(self, embed_dim, num_heads, key, bias=True):
        self.embed_dim = embed_dim
        self.num_heads = num_heads
        self.head_dim = embed_dim // num_heads
        assert self.head_dim * num_heads == embed_dim
        self.scaling = self.head_dim ** (-0.5)

        k1, k2 = jax.random.split(key)

        # xavier_uniform on (3E, E)
        bound_in = math.sqrt(6.0 / (3 * embed_dim + embed_dim))
        self.in_proj_weight = jax.random.uniform(
            k1, (3 * embed_dim, embed_dim), jnp.float32, -bound_in, bound_in)
        self.in_proj_bias = jnp.zeros((3 * embed_dim,), jnp.float32)

        # xavier_uniform on (E, E)
        bound_out = math.sqrt(6.0 / (embed_dim + embed_dim))
        self.out_proj_weight = jax.random.uniform(
            k2, (embed_dim, embed_dim), jnp.float32, -bound_out, bound_out)
        self.out_proj_bias = jnp.zeros((embed_dim,), jnp.float32)

        # Fold the 1/sqrt(head_dim) scaling into the q rows of the in-proj
        # weight/bias once at setup (removes an in-kernel VPU multiply).
        scale_vec = jnp.concatenate([
            jnp.full((embed_dim,), self.scaling, jnp.float32),
            jnp.ones((2 * embed_dim,), jnp.float32)])
        self._in_proj_weight_t_scaled = (self.in_proj_weight * scale_vec[:, None]).T
        self._in_proj_bias_scaled = self.in_proj_bias * scale_vec
        self._out_proj_weight_t = self.out_proj_weight.T

    def __call__(self, query, key=None, value=None, need_logits=True):
        # TODO(synk): only the eval-mode self-attention path is implemented
        # (k/v projected from `query`; no masks, dropout, bias_kv, zero-attn,
        # or incremental state).
        T, B, E = query.shape
        H, Dh = self.num_heads, self.head_dim

        x_flat = query.reshape(T * B, E)
        qkv = linear(x_flat, self._in_proj_weight_t_scaled,
                     self._in_proj_bias_scaled)            # (T*B, 3E)
        # Free contiguous view: row t*B+b, col proj*E + h*Dh + d.
        qkv = qkv.reshape(T, B, 3, H, Dh)

        outs = attention(qkv, need_logits=need_logits)
        if need_logits:
            ctx, logits, attn_weights = outs
        else:
            (ctx, attn_weights), logits = outs, None

        # ctx (T, B, H, Dh) is (T*B, E) in memory -> free reshape, no transpose.
        attn = linear(ctx.reshape(T * B, E), self._out_proj_weight_t,
                      self.out_proj_bias)
        attn = attn.reshape(T, B, E)

        # attn_weights: mean over heads (B, T, S); attn_logits: (B, H, T, S).
        return attn, (attn_weights, logits)


# ---------------------------------------------------------------------------
# Pure-JAX reference for sanity check
# ---------------------------------------------------------------------------
def reference_forward(mod, query):
    T, B, E = query.shape
    H, Dh = mod.num_heads, mod.head_dim
    qkv = query.reshape(T * B, E) @ mod.in_proj_weight.T + mod.in_proj_bias
    q, k, v = jnp.split(qkv, 3, axis=-1)
    q = (q * mod.scaling).reshape(T, B * H, Dh).transpose(1, 0, 2)
    k = k.reshape(T, B * H, Dh).transpose(1, 0, 2)
    v = v.reshape(T, B * H, Dh).transpose(1, 0, 2)
    logits = jnp.einsum('btd,bsd->bts', q, k)
    probs = jax.nn.softmax(logits, axis=-1)
    out = jnp.einsum('bts,bsd->btd', probs, v)
    attn = out.transpose(1, 0, 2).reshape(T * B, E) @ mod.out_proj_weight.T \
        + mod.out_proj_bias
    attn = attn.reshape(T, B, E)
    return attn, probs.reshape(B, H, T, T).mean(axis=1), logits.reshape(B, H, T, T)


if __name__ == "__main__":
    T, B, E, H = 8, 2, 32, 4
    root = jax.random.PRNGKey(0)
    k_param, k_x = jax.random.split(root)

    mod = MultiheadAttentionPallas(embed_dim=E, num_heads=H, key=k_param)
    query = jax.random.normal(k_x, (T, B, E), jnp.float32)  # Time x Batch x Channel

    attn, (attn_weights, attn_logits) = mod(query, query, query)
    jax.block_until_ready((attn, attn_weights, attn_logits))

    ref_attn, ref_w, ref_l = reference_forward(mod, query)
    assert jnp.allclose(attn_logits, ref_l, atol=1e-4, rtol=1e-4)
    assert jnp.allclose(attn_weights, ref_w, atol=2e-3, rtol=2e-3)
    assert jnp.allclose(attn, ref_attn, atol=2e-3, rtol=2e-3)

    print("KERNEL_OK")
</pallas_src>

<mosaic_0001>
module attributes {stable_mosaic.version = 11 : i64} {
  func.func @_linear_kernel(%arg0: i32, %arg1: i32, %arg2: memref<16x32xf32, #tpu.memory_space<vmem>>, %arg3: memref<32x96xf32, #tpu.memory_space<vmem>>, %arg4: memref<1x96xf32, #tpu.memory_space<vmem>>, %arg5: memref<16x96xf32, #tpu.memory_space<vmem>>) attributes {dimension_semantics = [#tpu.dimension_semantics<parallel>, #tpu.dimension_semantics<parallel>], iteration_bounds = array<i64: 1, 1>, scalar_prefetch = 0 : i64, scratch_operands = 0 : i64, tpu.core_type = #tpu.core_type<tc>, window_params = [{transform_indices = @transform_0, window_bounds = array<i64: 16, 32>}, {transform_indices = @transform_1, window_bounds = array<i64: 32, 96>}, {transform_indices = @transform_2, window_bounds = array<i64: 1, 96>}, {transform_indices = @transform_3, window_bounds = array<i64: 16, 96>}]} {
    %c0 = arith.constant 0 : index
    %c0_0 = arith.constant 0 : index
    %0 = vector.load %arg2[%c0, %c0_0] : memref<16x32xf32, #tpu.memory_space<vmem>>, vector<16x32xf32>
    %c0_1 = arith.constant 0 : index
    %c0_2 = arith.constant 0 : index
    %1 = vector.load %arg3[%c0_1, %c0_2] : memref<32x96xf32, #tpu.memory_space<vmem>>, vector<32x96xf32>
    %cst = arith.constant dense<0.000000e+00> : vector<16x96xf32>
    %2 = tpu.matmul %0, %1, %cst {dimension_numbers = #tpu.dot_dimension_numbers<[1], [0], [0], [1], [0, 0, 1, 1], [], []>} : vector<16x32xf32>, vector<32x96xf32>, vector<16x96xf32> -> vector<16x96xf32>
    %c0_3 = arith.constant 0 : index
    %c0_4 = arith.constant 0 : index
    %3 = vector.load %arg4[%c0_3, %c0_4] : memref<1x96xf32, #tpu.memory_space<vmem>>, vector<1x96xf32>
    %4 = vector.broadcast %3 : vector<1x96xf32> to vector<16x96xf32>
    %5 = arith.addf %2, %4 : vector<16x96xf32>
    %c0_5 = arith.constant 0 : index
    %c0_6 = arith.constant 0 : index
    %6 = vector.load %arg5[%c0_5, %c0_6] : memref<16x96xf32, #tpu.memory_space<vmem>>, vector<16x96xf32>
    tpu.vector_store %arg5[%c0_5, %c0_6], %5 {strides = array<i32>} : memref<16x96xf32, #tpu.memory_space<vmem>>, vector<16x96xf32>,
    return
  }
  func.func @transform_0(%arg0: i32, %arg1: i32) -> (i32, i32) {
    %c0_i32 = arith.constant 0 : i32
    %c0_i32_0 = arith.constant 0 : i32
    return %arg0, %c0_i32 : i32, i32
  }
  func.func @transform_1(%arg0: i32, %arg1: i32) -> (i32, i32) {
    %c0_i32 = arith.constant 0 : i32
    %c0_i32_0 = arith.constant 0 : i32
    return %c0_i32, %arg1 : i32, i32
  }
  func.func @transform_2(%arg0: i32, %arg1: i32) -> (i32, i32) {
    %c0_i32 = arith.constant 0 : i32
    %c0_i32_0 = arith.constant 0 : i32
    return %c0_i32, %arg1 : i32, i32
  }
  func.func @transform_3(%arg0: i32, %arg1: i32) -> (i32, i32) {
    %c0_i32 = arith.constant 0 : i32
    return %arg0, %arg1 : i32, i32
  }
}

</mosaic_0001>

<llo_original>
// kernel: tpu_custom_call.1
$region0: #{tpu_custom_call.1}
  #allocation0 [shape = 'u32[]', space=smem, size = 0x4, offset = 0x4, fixed_abs, tag = 'smem constant byte address 0x4 - core index']
  #allocation1 [shape = 'u32[144,128]{1,0:T(1,128)}', space=vmem, size = 0x12000, scoped, tag = 'internal scratch']
  %s0 = inlined_call_operand.hbm [shape: f32[16,32], index: 0, kind: input, shape index: {}]
  %s1 = inlined_call_operand.hbm [shape: f32[32,96], index: 1, kind: input, shape index: {}]
  %s2 = inlined_call_operand.vmem [shape: f32[1,96], index: 2, kind: input, shape index: {}]
  %s3 = inlined_call_operand.hbm [shape: f32[16,96], index: 3, kind: output, shape index: {}]
  %s4 = sld [smem:[#allocation0]]
  $region30: #{tpu_custom_call.1} parent=0
    _
  %s6 = ssub.s32 1, %s4
  %s7 = scalar_select 0, %s6, %s4
  $region1: #{tpu_custom_call.1} parent=0
    #allocation2 [shape = 'u8[8192]{0}', space=vmem, size = 0x2000, scoped, tag = 'input window, operand 0, single buffered']
    #allocation3 [shape = 's32[1]{0}', space=sflag, size = 0x4, scoped, tag = 'scoped memory for tpu_custom_call.1']
    #allocation4 [shape = 's32[1]{0}', space=sflag, size = 0x4, scoped, tag = 'scoped memory for tpu_custom_call.1']
    #allocation5 [shape = 'u8[16384]{0}', space=vmem, size = 0x4000, scoped, tag = 'input window, operand 1, single buffered']
    #allocation6 [shape = 's32[1]{0}', space=sflag, size = 0x4, scoped, tag = 'scoped memory for tpu_custom_call.1']
    #allocation7 [shape = 'u8[8192]{0}', space=vmem, size = 0x2000, scoped, tag = 'output window, operand 0, single buffered']
    %8 = vsyncpa [#allocation3], 0
    %9 = vsyncpa [#allocation6], 0
    %10 = vsyncpa [#allocation4], 0
    // Predicated region
    $region2: #{tpu_custom_call.1} parent=1 // pred_check
      _
    $region3: #{tpu_custom_call.1} parent=1 // pred_check_branch
      %12 = sbr.rel (0) target = $region5
    $region4: #{tpu_custom_call.1} parent=1 // pred_region
      %s14 = ssub.s32 256, 256
      %15 = vsyncadd [#allocation3], %s14
      %s16 = sshll.u32 [#allocation2], 4
      %s17 = int_to_ptr.vmem [resolvable:$true] %s16
      %22 = dma.hbm_to_vmem [thread:$0]  %s0, 256, %s17, [#allocation3], 128, 128, 8
    $region5: #{tpu_custom_call.1} parent=1 // pred_fallthru
      _
    // Predicated region
    $region6: #{tpu_custom_call.1} parent=1 // pred_check
      _
    $region7: #{tpu_custom_call.1} parent=1 // pred_check_branch
      %24 = sbr.rel (0) target = $region9
    $region8: #{tpu_custom_call.1} parent=1 // pred_region
      %s26 = ssub.s32 512, 512
      %27 = vsyncadd [#allocation6], %s26
      %s28 = sshll.u32 [#allocation5], 4
      %s29 = int_to_ptr.vmem [resolvable:$true] %s28
      %34 = dma.hbm_to_vmem [thread:$0]  %s1, 512, %s29, [#allocation6], 128, 128, 8
    $region9: #{tpu_custom_call.1} parent=1 // pred_fallthru
      _
    // Predicated region
    $region10: #{tpu_custom_call.1} parent=1 // pred_check
      _
    $region11: #{tpu_custom_call.1} parent=1 // pred_check_branch
      %36 = sbr.rel (0) target = $region13
    $region12: #{tpu_custom_call.1} parent=1 // pred_region
      _
    $region13: #{tpu_custom_call.1} parent=1 // pred_fallthru
      _
    // Predicated region
    $region14: #{tpu_custom_call.1} parent=1 // pred_check
      _
    $region15: #{tpu_custom_call.1} parent=1 // pred_check_branch
      %38 = sbr.rel (0) target = $region17
    $region16: #{tpu_custom_call.1} parent=1 // pred_region
      %39 = dma.done [#allocation3], 256
    $region17: #{tpu_custom_call.1} parent=1 // pred_fallthru
      _
    // Predicated region
    $region18: #{tpu_custom_call.1} parent=1 // pred_check
      _
    $region19: #{tpu_custom_call.1} parent=1 // pred_check_branch
      %41 = sbr.rel (0) target = $region21
    $region20: #{tpu_custom_call.1} parent=1 // pred_region
      %42 = dma.done [#allocation6], 512
    $region21: #{tpu_custom_call.1} parent=1 // pred_fallthru
      _
    %v43 = vld [vmem:[#allocation2] sm:$0xff]
    %v44 = vld [vmem:[#allocation2 + $0x8] sm:$0xff]
    %v45 = vld [vmem:[#allocation5] sm:$0xff]
    %v46 = vld [vmem:[#allocation5 + $0x8] sm:$0xff]
    %v47 = vld [vmem:[#allocation5 + $0x10] sm:$0xff]
    %v48 = vld [vmem:[#allocation5 + $0x18] sm:$0xff]
    %v49 = vld [vmem:[%s2] sm:$0x1]
    %v51 = vlaneseq
    %v52 = vshrl.u32 %v51, 7
    %v53 = vsub.s32 0, %v52
    %v54 = vrot.slane %v49, %v53
    %vm56 = vcmask 261120
    %v58 = vsel %vm56, %v43, 0
    %v61 = vsel %vm56, %v44, 0
    %63 = vmatprep.subr.mxu0 0.0
    %64 = vmatpush1.msra.mxu0 %v45
    %65 = vmatprep.subr.mxu0 0.0
    %66 = vmatpush1.msra.mxu0 %v46
    %67 = vmatprep.subr.mxu0 0.0
    %68 = vmatpush1.msra.mxu0 %v47
    %69 = vmatprep.subr.mxu0 0.0
    %70 = vmatpush1.msra.mxu0 %v48
    %71 = vmatprep.subr.mxu0 0.0
    %72 = vmatpush1.msra.mxu0 0.0
    %73 = vmatprep.subr.mxu0 0.0
    %74 = vmatpush1.msra.mxu0 0.0
    %75 = vmatprep.subr.mxu0 0.0
    %76 = vmatpush1.msra.mxu0 0.0
    %77 = vmatprep.subr.mxu0 0.0
    %78 = vmatpush1.msra.mxu0 0.0
    %79 = vmatprep.subr.mxu0 0.0
    %80 = vmatpush1.msra.mxu0 0.0
    %81 = vmatprep.subr.mxu0 0.0
    %82 = vmatpush1.msra.mxu0 0.0
    %83 = vmatprep.subr.mxu0 0.0
    %84 = vmatpush1.msra.mxu0 0.0
    %85 = vmatprep.subr.mxu0 0.0
    %86 = vmatpush1.msra.mxu0 0.0
    %87 = vmatprep.subr.mxu0 0.0
    %88 = vmatpush1.msra.mxu0 0.0
    %89 = vmatprep.subr.mxu0 0.0
    %90 = vmatpush1.msra.mxu0 0.0
    %91 = vmatprep.subr.mxu0 0.0
    %92 = vmatpush1.msra.mxu0 0.0
    %93 = vmatprep.subr.mxu0 0.0
    %94 = vmatpush1.msra.mxu0 0.0
    %95 = vmatprep.subr.mxu0 0.0
    %96 = vmatpush1.msra.mxu0 0.0
    %97 = vmatprep.subr.mxu0 0.0
    %98 = vmatpush1.msra.mxu0 0.0
    %99 = vmatprep.subr.mxu0 0.0
    %100 = vmatpush1.msra.mxu0 0.0
    %101 = vmatprep.subr.mxu0 0.0
    %102 = vmatpush1.msra.mxu0 0.0
    %103 = vmatprep.subr.mxu0 0.0
    %104 = vmatpush1.msra.mxu0 0.0
    %105 = vmatprep.subr.mxu0 0.0
    %106 = vmatpush1.msra.mxu0 0.0
    %107 = vmatprep.subr.mxu0 0.0
    %108 = vmatpush1.msra.mxu0 0.0
    %109 = vmatprep.subr.mxu0 0.0
    %110 = vmatpush1.msra.mxu0 0.0
    %111 = vmatprep.subr.mxu0 0.0
    %112 = vmatpush1.msra.mxu0 0.0
    %113 = vmatprep.subr.mxu0 0.0
    %114 = vmatpush1.msra.mxu0 0.0
    %115 = vmatprep.subr.mxu0 0.0
    %116 = vmatpush1.msra.mxu0 0.0
    %117 = vmatprep.subr.mxu0 0.0
    %118 = vmatpush1.msra.mxu0 0.0
    %119 = vmatprep.subr.mxu0 0.0
    %120 = vmatpush1.msra.mxu0 0.0
    %121 = vmatprep.subr.mxu0 0.0
    %122 = vmatpush1.msra.mxu0 0.0
    %123 = vmatprep.subr.mxu0 0.0
    %124 = vmatpush1.msra.mxu0 0.0
    %125 = vmatprep.subr.mxu0 0.0
    %126 = vmatpush1.msra.mxu0 0.0
    %127 = vmatprep.mubr.f32.mxu0 0.0
    %128 = vmatmul.mubr.f32.gmra.mrb[0].mxu0 %v58
    %v129 = vpop.f32.mrb[0].mxu0
    %v130 = vadd.f32 %v54, %v129
    %v131 = vpop.f32.mrb[0].mxu0
    %132 = vmatprep.mubr.f32.mxu0 0.0
    %133 = vmatmul.mubr.f32.gmra.mrb[0].mxu0 %v61
    %v134 = vpop.f32.mrb[0].mxu0
    %v135 = vadd.f32 %v54, %v134
    %v136 = vpop.f32.mrb[0].mxu0
    %137 = vdwg.mxu0
    %vm138 = vcmask 785408
    %139 = vst.msk [vmem:[#allocation7] sm:$0xff] %vm138, %v130
    %140 = vst.msk [vmem:[#allocation7 + $0x8] sm:$0xff] %vm138, %v135
    // Predicated region
    $region22: #{tpu_custom_call.1} parent=1 // pred_check
      _
    $region23: #{tpu_custom_call.1} parent=1 // pred_check_branch
      %142 = sbr.rel (0) target = $region25
    $region24: #{tpu_custom_call.1} parent=1 // pred_region
      %s144 = ssub.s32 256, 256
      %145 = vsyncadd [#allocation4], %s144
      %s146 = sshll.u32 [#allocation7], 4
      %s147 = int_to_ptr.vmem [resolvable:$true] %s146
      %152 = dma.vmem_to_hbm [thread:$0]  %s147, 256, %s3, [#allocation4], 128, 128, 8
    $region25: #{tpu_custom_call.1} parent=1 // pred_fallthru
      _
    // Predicated region
    $region26: #{tpu_custom_call.1} parent=1 // pred_check
      _
    $region27: #{tpu_custom_call.1} parent=1 // pred_check_branch
      %154 = sbr.rel (0) target = $region29
    $region28: #{tpu_custom_call.1} parent=1 // pred_region
      %155 = dma.done [#allocation4], 256
    $region29: #{tpu_custom_call.1} parent=1 // pred_fallthru
      _
    %156 = vsyncpa [#allocation3], 1
    %157 = vsyncpa [#allocation6], 1
    %158 = vsyncpa [#allocation4], 1

</llo_original>
